<compile_context>
chip_gen: v7x
topology: tpu7x:2x2x1
jax: 0.10.0
libtpu: 0.0.40
codegen_flags: <defaults>
</compile_context>

<pallas_src>
import math

import numpy as np

import jax
import jax.numpy as jnp
from jax.experimental import pallas as pl
from jax.experimental.pallas import tpu as pltpu

_INV_SQRT2 = 1.0 / math.sqrt(2.0)


def _gelu_exact(x):
    # Matches torch.nn.functional.gelu (default, erf-based, exact).
    return 0.5 * x * (1.0 + jax.lax.erf(x * _INV_SQRT2))


def _make_block_kernel(L, TL, Cin, Cmid, Cout, K, dilation):
    """Fused ConvBlock kernel: gelu -> conv1 -> gelu -> conv2 -> + residual."""
    rf = (K - 1) * dilation + 1
    pad = rf // 2                        # left 'same' pad (also handles even-rf trim)
    pad_hi = (K - 1) * dilation - pad    # right reach of a tap past the output row
    h_len = TL + pad + pad_hi            # rows of h needed for TL conv2 outputs
    x_len = TL + 2 * (pad + pad_hi)      # padded-input rows needed for h_len rows of h

    def kernel(x_ref, w1_ref, b1_ref, w2_ref, b2_ref, o_ref, xg_ref, h1_ref):
        li = pl.program_id(1)
        start = pl.multiple_of(li * TL, TL)   # window start into the padded input

        # gelu(input) once into a VMEM scratch.  gelu(0) == 0, so applying gelu
        # after the zero halo is equivalent to conv1's 'same' zero padding of
        # gelu(x).
        xw = x_ref[0, pl.ds(start, x_len), :].astype(jnp.float32)
        xg_ref[...] = _gelu_exact(xw)

        # conv1 over the halo-extended window (h_len rows), f32 accumulation.
        acc1 = jnp.zeros((h_len, Cmid), jnp.float32)
        for j in range(K):                          # static taps
            acc1 = acc1 + jnp.dot(
                xg_ref[pl.ds(j * dilation, h_len), :],
                w1_ref[j].astype(jnp.float32),
                preferred_element_type=jnp.float32,
            )
        acc1 = acc1 + b1_ref[...].astype(jnp.float32)

        # conv2's 'same' padding zero-pads gelu(h) outside [0, L): mask the
        # halo rows that fall outside the valid time range to zero.
        r = jax.lax.broadcasted_iota(jnp.int32, (h_len, 1), 0)
        g = li * TL - pad + r
        valid = (g >= 0) & (g < L)
        h1_ref[...] = jnp.where(valid, _gelu_exact(acc1), 0.0)

        # conv2 over the output tile, f32 accumulation, bias + residual.
        acc2 = jnp.zeros((TL, Cout), jnp.float32)
        for j in range(K):
            acc2 = acc2 + jnp.dot(
                h1_ref[pl.ds(j * dilation, TL), :],
                w2_ref[j].astype(jnp.float32),
                preferred_element_type=jnp.float32,
            )
        acc2 = acc2 + b2_ref[...].astype(jnp.float32)

        # Residual comes from the interior of the already-resident input block
        # (x_pad row t + 2*pad == x row t): no separate residual HBM stream.
        res = x_ref[0, pl.ds(start + 2 * pad, TL), :].astype(jnp.float32)
        o_ref[0] = (acc2 + res).astype(o_ref.dtype)

    return kernel, pad, pad_hi, h_len, x_len


def conv_block(x, w1, b1, w2, b2, dilation, *, tile_l=512):
    """Fused ConvBlock: gelu -> SamePadConv -> gelu -> SamePadConv -> + x.

    x:  (B, L, Cin)
    w1: (K, Cin, Cout), b1: (Cout,)   (PyTorch Conv1d weight is (Cout, Cin, K))
    w2: (K, Cout, Cout), b2: (Cout,)
    Requires Cin == Cout (the ConvBlock residual add, as in the PyTorch spec).
    """
    B, L, Cin = x.shape
    K, _, Cmid = w1.shape
    K2, _, Cout = w2.shape
    assert K2 == K and Cin == Cout, "ConvBlock residual requires Cin == Cout"

    TL = L if L <= tile_l else tile_l
    nL = -(-L // TL)

    kernel, pad, pad_hi, h_len, x_len = _make_block_kernel(
        L, TL, Cin, Cmid, Cout, K, dilation)

    # Single host-side zero pad per ConvBlock (halo for both convs at once):
    # 2*pad on the left, 2*pad_hi plus the L-tile round-up on the right.
    # TODO(synk): an in-kernel halo (manual DMA / element-offset blocks) would
    # remove this remaining padded copy of the activation.
    lpad_total = nL * TL + 2 * (pad + pad_hi)
    right = lpad_total - L - 2 * pad
    x_pad = jnp.pad(x, ((0, 0), (2 * pad, right), (0, 0)))

    b1_2 = b1.reshape(1, Cmid)
    b2_2 = b2.reshape(1, Cout)

    grid_spec = pltpu.PrefetchScalarGridSpec(
        num_scalar_prefetch=0,
        grid=(B, nL),
        in_specs=[
            # Full padded length per batch; block index is constant in the
            # L-tile axis so it stays resident (not re-DMA'd per tile).
            pl.BlockSpec((1, lpad_total, Cin), lambda b, l: (b, 0, 0)),
            # Weights / biases: constant index_map -> resident, no re-DMA.
            pl.BlockSpec((K, Cin, Cmid), lambda b, l: (0, 0, 0)),
            pl.BlockSpec((1, Cmid), lambda b, l: (0, 0)),
            pl.BlockSpec((K, Cmid, Cout), lambda b, l: (0, 0, 0)),
            pl.BlockSpec((1, Cout), lambda b, l: (0, 0)),
        ],
        out_specs=pl.BlockSpec((1, TL, Cout), lambda b, l: (b, l, 0)),
        scratch_shapes=[
            pltpu.VMEM((x_len, Cin), jnp.float32),   # gelu(x) window
            pltpu.VMEM((h_len, Cmid), jnp.float32),  # gelu(conv1(...)) window
        ],
    )

    return pl.pallas_call(
        kernel,
        out_shape=jax.ShapeDtypeStruct((B, L, Cout), x.dtype),
        grid_spec=grid_spec,
        compiler_params=pltpu.CompilerParams(
            dimension_semantics=("parallel", "parallel"),
            vmem_limit_bytes=64 * 1024 * 1024,
        ),
    )(x_pad, w1, b1_2, w2, b2_2)


def dilated_conv_encoder(x, params):
    """x: (B, L, C).  params: list of (w1, b1, w2, b2); block i uses dilation 2**i."""
    for i, (w1, b1, w2, b2) in enumerate(params):
        x = conv_block(x, w1, b1, w2, b2, dilation=2 ** i)
    return x


def init_params(key, in_channels, channels, kernel_size):
    params = []
    cin = in_channels
    for cout in channels:
        key, k1, k2, k3, k4 = jax.random.split(key, 5)
        w1 = 0.1 * jax.random.normal(k1, (kernel_size, cin, cout), jnp.float32)
        b1 = 0.1 * jax.random.normal(k2, (cout,), jnp.float32)
        w2 = 0.1 * jax.random.normal(k3, (kernel_size, cout, cout), jnp.float32)
        b2 = 0.1 * jax.random.normal(k4, (cout,), jnp.float32)
        params.append((w1, b1, w2, b2))
        cin = cout
    return params


# ----- pure-JAX reference (for correctness check only) -----
def _ref_conv(x_blc, w, b, dilation):
    K = w.shape[0]
    rf = (K - 1) * dilation + 1
    pad = rf // 2
    x_ncw = jnp.transpose(x_blc, (0, 2, 1))
    w_oiw = jnp.transpose(w, (2, 1, 0))
    out = jax.lax.conv_general_dilated(
        x_ncw, w_oiw, window_strides=(1,), padding=[(pad, pad)],
        rhs_dilation=(dilation,), dimension_numbers=("NCH", "OIH", "NCH"))
    out = out + b[None, :, None]
    if rf % 2 == 0:
        out = out[:, :, :-1]
    return jnp.transpose(out, (0, 2, 1))


def _ref_encoder(x, params):
    for i, (w1, b1, w2, b2) in enumerate(params):
        d = 2 ** i
        r = x
        h = _gelu_exact(x)
        h = _ref_conv(h, w1, b1, d)
        h = _gelu_exact(h)
        h = _ref_conv(h, w2, b2, d)
        x = h + r
    return x


if __name__ == "__main__":
    key = jax.random.PRNGKey(0)
    B, C, L = 2, 8, 16
    channels = [8, 8, 8]       # equal channels: ConvBlock's residual add requires it
    kernel_size = 3

    kx, kp = jax.random.split(key)
    # PyTorch layout is (B, C, L); kernel layout is (B, L, C).
    x_ncl = jax.random.normal(kx, (B, C, L), jnp.float32)
    x = jnp.transpose(x_ncl, (0, 2, 1))

    params = init_params(kp, C, channels, kernel_size)

    out = dilated_conv_encoder(x, params)
    out = jax.block_until_ready(out)
    assert out.shape == (B, L, channels[-1])

    ref = _ref_encoder(x, params)
    if not np.allclose(np.asarray(out), np.asarray(ref), rtol=1e-4, atol=1e-4):
        raise AssertionError("Pallas output does not match reference")

    print("KERNEL_OK")
</pallas_src>

<mosaic_0001>
module attributes {stable_mosaic.version = 11 : i64} {
  func.func @kernel(%arg0: i32, %arg1: i32, %arg2: memref<1x20x8xf32, #tpu.memory_space<vmem>>, %arg3: memref<3x8x8xf32, #tpu.memory_space<vmem>>, %arg4: memref<1x8xf32, #tpu.memory_space<vmem>>, %arg5: memref<3x8x8xf32, #tpu.memory_space<vmem>>, %arg6: memref<1x8xf32, #tpu.memory_space<vmem>>, %arg7: memref<1x16x8xf32, #tpu.memory_space<vmem>>, %arg8: memref<20x8xf32, #tpu.memory_space<vmem>>, %arg9: memref<18x8xf32, #tpu.memory_space<vmem>>) attributes {dimension_semantics = [#tpu.dimension_semantics<parallel>, #tpu.dimension_semantics<parallel>], iteration_bounds = array<i64: 2, 1>, scalar_prefetch = 0 : i64, scratch_operands = 2 : i64, tpu.core_type = #tpu.core_type<tc>, window_params = [{transform_indices = @transform_0, window_bounds = array<i64: 1, 20, 8>}, {pipeline_mode = #tpu.pipeline_mode<synchronous>, transform_indices = @transform_1, window_bounds = array<i64: 3, 8, 8>}, {pipeline_mode = #tpu.pipeline_mode<synchronous>, transform_indices = @transform_2, window_bounds = array<i64: 1, 8>}, {pipeline_mode = #tpu.pipeline_mode<synchronous>, transform_indices = @transform_3, window_bounds = array<i64: 3, 8, 8>}, {pipeline_mode = #tpu.pipeline_mode<synchronous>, transform_indices = @transform_4, window_bounds = array<i64: 1, 8>}, {transform_indices = @transform_5, window_bounds = array<i64: 1, 16, 8>}]} {
    %c16_i32 = arith.constant 16 : i32
    %0 = arith.muli %arg1, %c16_i32 : i32
    %1 = tpu.assume_multiple %0, 16 : i32
    %c0 = arith.constant 0 : index
    %2 = arith.index_cast %1 : i32 to index
    %c0_0 = arith.constant 0 : index
    %3 = vector.load %arg2[%c0, %2, %c0_0] : memref<1x20x8xf32, #tpu.memory_space<vmem>>, vector<1x20x8xf32>
    %4 = vector.shape_cast %3 : vector<1x20x8xf32> to vector<20x8xf32>
    %cst = arith.constant 5.000000e-01 : f32
    %5 = vector.broadcast %cst : f32 to vector<20x8xf32>
    %6 = arith.mulf %5, %4 : vector<20x8xf32>
    %cst_1 = arith.constant 0.707106769 : f32
    %7 = vector.broadcast %cst_1 : f32 to vector<20x8xf32>
    %8 = arith.mulf %4, %7 : vector<20x8xf32>
    %9 = math.erf %8 : vector<20x8xf32>
    %cst_2 = arith.constant 1.000000e+00 : f32
    %10 = vector.broadcast %cst_2 : f32 to vector<20x8xf32>
    %11 = arith.addf %10, %9 : vector<20x8xf32>
    %12 = arith.mulf %6, %11 : vector<20x8xf32>
    %c0_3 = arith.constant 0 : index
    %c0_4 = arith.constant 0 : index
    %13 = vector.load %arg8[%c0_3, %c0_4] : memref<20x8xf32, #tpu.memory_space<vmem>>, vector<20x8xf32>
    tpu.vector_store %arg8[%c0_3, %c0_4], %12 {strides = array<i32>} : memref<20x8xf32, #tpu.memory_space<vmem>>, vector<20x8xf32>,
    %cst_5 = arith.constant 0.000000e+00 : f32
    %14 = vector.broadcast %cst_5 : f32 to vector<18x8xf32>
    %c0_6 = arith.constant 0 : index
    %c0_7 = arith.constant 0 : index
    %15 = vector.load %arg8[%c0_6, %c0_7] : memref<20x8xf32, #tpu.memory_space<vmem>>, vector<18x8xf32>
    %c0_8 = arith.constant 0 : index
    %c0_9 = arith.constant 0 : index
    %c0_10 = arith.constant 0 : index
    %16 = vector.load %arg3[%c0_8, %c0_9, %c0_10] : memref<3x8x8xf32, #tpu.memory_space<vmem>>, vector<1x8x8xf32>
    %17 = vector.shape_cast %16 : vector<1x8x8xf32> to vector<8x8xf32>
    %cst_11 = arith.constant dense<0.000000e+00> : vector<18x8xf32>
    %18 = tpu.matmul %15, %17, %cst_11 {dimension_numbers = #tpu.dot_dimension_numbers<[1], [0], [0], [1], [0, 0, 1, 1], [], []>} : vector<18x8xf32>, vector<8x8xf32>, vector<18x8xf32> -> vector<18x8xf32>
    %19 = arith.addf %14, %18 : vector<18x8xf32>
    %c1 = arith.constant 1 : index
    %c0_12 = arith.constant 0 : index
    %20 = vector.load %arg8[%c1, %c0_12] : memref<20x8xf32, #tpu.memory_space<vmem>>, vector<18x8xf32>
    %c1_13 = arith.constant 1 : index
    %c0_14 = arith.constant 0 : index
    %c0_15 = arith.constant 0 : index
    %21 = vector.load %arg3[%c1_13, %c0_14, %c0_15] : memref<3x8x8xf32, #tpu.memory_space<vmem>>, vector<1x8x8xf32>
    %22 = vector.shape_cast %21 : vector<1x8x8xf32> to vector<8x8xf32>
    %cst_16 = arith.constant dense<0.000000e+00> : vector<18x8xf32>
    %23 = tpu.matmul %20, %22, %cst_16 {dimension_numbers = #tpu.dot_dimension_numbers<[1], [0], [0], [1], [0, 0, 1, 1], [], []>} : vector<18x8xf32>, vector<8x8xf32>, vector<18x8xf32> -> vector<18x8xf32>
    %24 = arith.addf %19, %23 : vector<18x8xf32>
    %c2 = arith.constant 2 : index
    %c0_17 = arith.constant 0 : index
    %25 = vector.load %arg8[%c2, %c0_17] : memref<20x8xf32, #tpu.memory_space<vmem>>, vector<18x8xf32>
    %c2_18 = arith.constant 2 : index
    %c0_19 = arith.constant 0 : index
    %c0_20 = arith.constant 0 : index
    %26 = vector.load %arg3[%c2_18, %c0_19, %c0_20] : memref<3x8x8xf32, #tpu.memory_space<vmem>>, vector<1x8x8xf32>
    %27 = vector.shape_cast %26 : vector<1x8x8xf32> to vector<8x8xf32>
    %cst_21 = arith.constant dense<0.000000e+00> : vector<18x8xf32>
    %28 = tpu.matmul %25, %27, %cst_21 {dimension_numbers = #tpu.dot_dimension_numbers<[1], [0], [0], [1], [0, 0, 1, 1], [], []>} : vector<18x8xf32>, vector<8x8xf32>, vector<18x8xf32> -> vector<18x8xf32>
    %29 = arith.addf %24, %28 : vector<18x8xf32>
    %c0_22 = arith.constant 0 : index
    %c0_23 = arith.constant 0 : index
    %30 = vector.load %arg4[%c0_22, %c0_23] : memref<1x8xf32, #tpu.memory_space<vmem>>, vector<1x8xf32>
    %31 = vector.broadcast %30 : vector<1x8xf32> to vector<18x8xf32>
    %32 = arith.addf %29, %31 : vector<18x8xf32>
    %33 = tpu.iota {dimensions = array<i32: 0>} : vector<18x1xi32>
    %c16_i32_24 = arith.constant 16 : i32
    %34 = arith.muli %arg1, %c16_i32_24 : i32
    %c1_i32 = arith.constant 1 : i32
    %35 = arith.subi %34, %c1_i32 : i32
    %36 = vector.broadcast %35 : i32 to vector<18x1xi32>
    %37 = arith.addi %36, %33 : vector<18x1xi32>
    %c0_i32 = arith.constant 0 : i32
    %38 = vector.broadcast %c0_i32 : i32 to vector<18x1xi32>
    %39 = arith.cmpi sge, %37, %38 : vector<18x1xi32>
    %c16_i32_25 = arith.constant 16 : i32
    %40 = vector.broadcast %c16_i32_25 : i32 to vector<18x1xi32>
    %41 = arith.cmpi slt, %37, %40 : vector<18x1xi32>
    %42 = arith.andi %39, %41 : vector<18x1xi1>
    %cst_26 = arith.constant 5.000000e-01 : f32
    %43 = vector.broadcast %cst_26 : f32 to vector<18x8xf32>
    %44 = arith.mulf %43, %32 : vector<18x8xf32>
    %cst_27 = arith.constant 0.707106769 : f32
    %45 = vector.broadcast %cst_27 : f32 to vector<18x8xf32>
    %46 = arith.mulf %32, %45 : vector<18x8xf32>
    %47 = math.erf %46 : vector<18x8xf32>
    %cst_28 = arith.constant 1.000000e+00 : f32
    %48 = vector.broadcast %cst_28 : f32 to vector<18x8xf32>
    %49 = arith.addf %48, %47 : vector<18x8xf32>
    %50 = arith.mulf %44, %49 : vector<18x8xf32>
    %cst_29 = arith.constant 0.000000e+00 : f32
    %51 = vector.shape_cast %42 : vector<18x1xi1> to vector<18x1xi1>
    %52 = vector.broadcast %51 : vector<18x1xi1> to vector<18x8xi1>
    %53 = vector.broadcast %cst_29 : f32 to vector<18x8xf32>
    %54 = arith.select %52, %50, %53 : vector<18x8xi1>, vector<18x8xf32>
    %c0_30 = arith.constant 0 : index
    %c0_31 = arith.constant 0 : index
    %55 = vector.load %arg9[%c0_30, %c0_31] : memref<18x8xf32, #tpu.memory_space<vmem>>, vector<18x8xf32>
    tpu.vector_store %arg9[%c0_30, %c0_31], %54 {strides = array<i32>} : memref<18x8xf32, #tpu.memory_space<vmem>>, vector<18x8xf32>,
    %cst_32 = arith.constant 0.000000e+00 : f32
    %56 = vector.broadcast %cst_32 : f32 to vector<16x8xf32>
    %c0_33 = arith.constant 0 : index
    %c0_34 = arith.constant 0 : index
    %57 = vector.load %arg9[%c0_33, %c0_34] : memref<18x8xf32, #tpu.memory_space<vmem>>, vector<16x8xf32>
    %c0_35 = arith.constant 0 : index
    %c0_36 = arith.constant 0 : index
    %c0_37 = arith.constant 0 : index
    %58 = vector.load %arg5[%c0_35, %c0_36, %c0_37] : memref<3x8x8xf32, #tpu.memory_space<vmem>>, vector<1x8x8xf32>
    %59 = vector.shape_cast %58 : vector<1x8x8xf32> to vector<8x8xf32>
    %cst_38 = arith.constant dense<0.000000e+00> : vector<16x8xf32>
    %60 = tpu.matmul %57, %59, %cst_38 {dimension_numbers = #tpu.dot_dimension_numbers<[1], [0], [0], [1], [0, 0, 1, 1], [], []>} : vector<16x8xf32>, vector<8x8xf32>, vector<16x8xf32> -> vector<16x8xf32>
    %61 = arith.addf %56, %60 : vector<16x8xf32>
    %c1_39 = arith.constant 1 : index
    %c0_40 = arith.constant 0 : index
    %62 = vector.load %arg9[%c1_39, %c0_40] : memref<18x8xf32, #tpu.memory_space<vmem>>, vector<16x8xf32>
    %c1_41 = arith.constant 1 : index
    %c0_42 = arith.constant 0 : index
    %c0_43 = arith.constant 0 : index
    %63 = vector.load %arg5[%c1_41, %c0_42, %c0_43] : memref<3x8x8xf32, #tpu.memory_space<vmem>>, vector<1x8x8xf32>
    %64 = vector.shape_cast %63 : vector<1x8x8xf32> to vector<8x8xf32>
    %cst_44 = arith.constant dense<0.000000e+00> : vector<16x8xf32>
    %65 = tpu.matmul %62, %64, %cst_44 {dimension_numbers = #tpu.dot_dimension_numbers<[1], [0], [0], [1], [0, 0, 1, 1], [], []>} : vector<16x8xf32>, vector<8x8xf32>, vector<16x8xf32> -> vector<16x8xf32>
    %66 = arith.addf %61, %65 : vector<16x8xf32>
    %c2_45 = arith.constant 2 : index
    %c0_46 = arith.constant 0 : index
    %67 = vector.load %arg9[%c2_45, %c0_46] : memref<18x8xf32, #tpu.memory_space<vmem>>, vector<16x8xf32>
    %c2_47 = arith.constant 2 : index
    %c0_48 = arith.constant 0 : index
    %c0_49 = arith.constant 0 : index
    %68 = vector.load %arg5[%c2_47, %c0_48, %c0_49] : memref<3x8x8xf32, #tpu.memory_space<vmem>>, vector<1x8x8xf32>
    %69 = vector.shape_cast %68 : vector<1x8x8xf32> to vector<8x8xf32>
    %cst_50 = arith.constant dense<0.000000e+00> : vector<16x8xf32>
    %70 = tpu.matmul %67, %69, %cst_50 {dimension_numbers = #tpu.dot_dimension_numbers<[1], [0], [0], [1], [0, 0, 1, 1], [], []>} : vector<16x8xf32>, vector<8x8xf32>, vector<16x8xf32> -> vector<16x8xf32>
    %71 = arith.addf %66, %70 : vector<16x8xf32>
    %c0_51 = arith.constant 0 : index
    %c0_52 = arith.constant 0 : index
    %72 = vector.load %arg6[%c0_51, %c0_52] : memref<1x8xf32, #tpu.memory_space<vmem>>, vector<1x8xf32>
    %73 = vector.broadcast %72 : vector<1x8xf32> to vector<16x8xf32>
    %74 = arith.addf %71, %73 : vector<16x8xf32>
    %c2_i32 = arith.constant 2 : i32
    %75 = arith.addi %1, %c2_i32 : i32
    %c0_53 = arith.constant 0 : index
    %76 = arith.index_cast %75 : i32 to index
    %c0_54 = arith.constant 0 : index
    %77 = vector.load %arg2[%c0_53, %76, %c0_54] : memref<1x20x8xf32, #tpu.memory_space<vmem>>, vector<1x16x8xf32>
    %78 = vector.shape_cast %77 : vector<1x16x8xf32> to vector<16x8xf32>
    %79 = arith.addf %74, %78 : vector<16x8xf32>
    %c0_55 = arith.constant 0 : index
    %c0_56 = arith.constant 0 : index
    %c0_57 = arith.constant 0 : index
    %80 = vector.load %arg7[%c0_55, %c0_56, %c0_57] : memref<1x16x8xf32, #tpu.memory_space<vmem>>, vector<1x16x8xf32>
    %81 = vector.shape_cast %80 : vector<1x16x8xf32> to vector<16x8xf32>
    %82 = vector.shape_cast %79 : vector<16x8xf32> to vector<1x16x8xf32>
    tpu.vector_store %arg7[%c0_55, %c0_56, %c0_57], %82 {strides = array<i32>} : memref<1x16x8xf32, #tpu.memory_space<vmem>>, vector<1x16x8xf32>,
    return
  }
  func.func @transform_0(%arg0: i32, %arg1: i32) -> (i32, i32, i32) {
    %c0_i32 = arith.constant 0 : i32
    %c0_i32_0 = arith.constant 0 : i32
    %c0_i32_1 = arith.constant 0 : i32
    return %arg0, %c0_i32, %c0_i32_0 : i32, i32, i32
  }
  func.func @transform_1(%arg0: i32, %arg1: i32) -> (i32, i32, i32) {
    %c0_i32 = arith.constant 0 : i32
    %c0_i32_0 = arith.constant 0 : i32
    %c0_i32_1 = arith.constant 0 : i32
    %c0_i32_2 = arith.constant 0 : i32
    return %c0_i32, %c0_i32_0, %c0_i32_1 : i32, i32, i32
  }
  func.func @transform_2(%arg0: i32, %arg1: i32) -> (i32, i32) {
    %c0_i32 = arith.constant 0 : i32
    %c0_i32_0 = arith.constant 0 : i32
    %c0_i32_1 = arith.constant 0 : i32
    return %c0_i32, %c0_i32_0 : i32, i32
  }
  func.func @transform_3(%arg0: i32, %arg1: i32) -> (i32, i32, i32) {
    %c0_i32 = arith.constant 0 : i32
    %c0_i32_0 = arith.constant 0 : i32
    %c0_i32_1 = arith.constant 0 : i32
    %c0_i32_2 = arith.constant 0 : i32
    return %c0_i32, %c0_i32_0, %c0_i32_1 : i32, i32, i32
  }
  func.func @transform_4(%arg0: i32, %arg1: i32) -> (i32, i32) {
    %c0_i32 = arith.constant 0 : i32
    %c0_i32_0 = arith.constant 0 : i32
    %c0_i32_1 = arith.constant 0 : i32
    return %c0_i32, %c0_i32_0 : i32, i32
  }
  func.func @transform_5(%arg0: i32, %arg1: i32) -> (i32, i32, i32) {
    %c0_i32 = arith.constant 0 : i32
    %c0_i32_0 = arith.constant 0 : i32
    return %arg0, %arg1, %c0_i32 : i32, i32, i32
  }
}

</mosaic_0001>

<llo_original>
// kernel: tpu_custom_call.1
$region0: #{tpu_custom_call.1}
  #allocation0 [shape = 'u32[]', space=smem, size = 0x4, offset = 0x4, fixed_abs, tag = 'smem constant byte address 0x4 - core index']
  #allocation1 [shape = 'u32[144,128]{1,0:T(1,128)}', space=vmem, size = 0x12000, scoped, tag = 'internal scratch']
  #allocation2 [shape = 'f32[20,8]{1,0:T(8,128)}', space=vmem, size = 0x3000, scoped, tag = 'scratch operand']
  #allocation3 [shape = 'f32[18,8]{1,0:T(8,128)}', space=vmem, size = 0x3000, scoped, tag = 'scratch operand']
  %s0 = inlined_call_operand.hbm [shape: f32[2,20,8], index: 0, kind: input, shape index: {}]
  %s1 = inlined_call_operand.hbm [shape: f32[3,8,8], index: 1, kind: input, shape index: {}]
  %s2 = inlined_call_operand.hbm [shape: f32[1,8], index: 2, kind: input, shape index: {}]
  %s3 = inlined_call_operand.hbm [shape: f32[3,8,8], index: 3, kind: input, shape index: {}]
  %s4 = inlined_call_operand.hbm [shape: f32[1,8], index: 4, kind: input, shape index: {}]
  %s5 = inlined_call_operand.hbm [shape: f32[2,16,8], index: 5, kind: output, shape index: {}]
  %s6 = sld [smem:[#allocation0]]
  $region73: #{tpu_custom_call.1} parent=0
    _
  %s8 = ssub.s32 1, %s6
  %s9 = scalar_select 0, %s8, %s6
  $region1: #{tpu_custom_call.1} parent=0
    #allocation4 [shape = 'u8[24576]{0}', space=vmem, size = 0x6000, scoped, tag = 'input window, operand 0']
    #allocation5 [shape = 's32[2]{0}', space=sflag, size = 0x8, scoped, tag = 'scoped memory for tpu_custom_call.1']
    #allocation6 [shape = 's32[2]{0}', space=sflag, size = 0x8, scoped, tag = 'scoped memory for tpu_custom_call.1']
    #allocation7 [shape = 'u8[12288]{0}', space=vmem, size = 0x3000, scoped, tag = 'input window, operand 1, single buffered']
    #allocation8 [shape = 's32[1]{0}', space=sflag, size = 0x4, scoped, tag = 'scoped memory for tpu_custom_call.1']
    #allocation9 [shape = 'u8[512]{0}', space=vmem, size = 0x400, scoped, tag = 'input window, operand 2, single buffered']
    #allocation10 [shape = 'u8[12288]{0}', space=vmem, size = 0x3000, scoped, tag = 'input window, operand 3, single buffered']
    #allocation11 [shape = 's32[1]{0}', space=sflag, size = 0x4, scoped, tag = 'scoped memory for tpu_custom_call.1']
    #allocation12 [shape = 'u8[512]{0}', space=vmem, size = 0x400, scoped, tag = 'input window, operand 4, single buffered']
    #allocation13 [shape = 'u8[16384]{0}', space=vmem, size = 0x4000, scoped, tag = 'output window, operand 0']
    %10 = vsyncpa [#allocation5], 0
    %s11 = scalar_lea.sflag [#allocation5], 1
    %12 = vsyncpa %s11, 0
    %13 = vsyncpa [#allocation8], 0
    %14 = vsyncpa [#allocation11], 0
    %15 = vsyncpa [#allocation6], 0
    %s16 = scalar_lea.sflag [#allocation6], 1
    %17 = vsyncpa %s16, 0
    loop: start=0, step=1, limit=4
    $region2: #{tpu_custom_call.1} parent=1 // loop_pre_header
      _
    $region3: #{tpu_custom_call.1} parent=1 // loop_header
      %s19 = sphi 0, %s23
      %p20 = scmp.ge.s32.totalorder %s19, 4
      %s26 = sphi 0, %s38
      %s27 = sphi 0, %s34
      %s28 = sphi 0, %s26
      %s29 = sphi 0, %s27
      %s30 = sphi 0, %s28
      %s31 = sphi 0, %s29
      %s41 = sphi 0, %s43
      %s44 = sphi 0, %s41
      %s45 = sphi 0, %s44
      %s61 = sphi 0, %s45
      %s65 = sphi 0, %s65
      %s67 = sphi 0, %s65
      %s68 = sphi 0, %s67
      %s82 = sphi 0, %s68
      %s86 = sphi 0, %s86
      %s88 = sphi 0, %s86
      %s89 = sphi 0, %s88
      %s103 = sphi 0, %s89
      %s107 = sphi 0, %s107
      %s109 = sphi 0, %s107
      %s110 = sphi 0, %s109
      %s124 = sphi 0, %s110
      %s128 = sphi 0, %s128
      %s130 = sphi 0, %s128
      %s131 = sphi 0, %s130
      %s145 = sphi 0, %s131
      %s153 = sphi 0, %s155
      %s156 = sphi 0, %s153
      %s157 = sphi 0, %s156
      %s173 = sphi 0, %s157
    $region4: #{tpu_custom_call.1} parent=1 // loop_header_branch
      %22 = sbr.rel (%p20) target = $region8
    $region5: #{tpu_custom_call.1} parent=1 // loop_body
      %s24 = ssub.s32 %s19, 1
      %s25 = ssub.s32 %s19, 2
      %s32 = sadd.s32 1, %s27
      %p33 = scmp.ge.s32.totalorder %s32, 1
      %s34 = scalar_select %p33, 0, %s32
      %s35 = sadd.s32 1, %s26
      %s36 = scalar_select %p33, %s35, %s26
      %p37 = scmp.ge.s32.totalorder %s36, 2
      %s38 = scalar_select %p37, 0, %s36
      %s39 = ssub.s32 %s26, %s38
      %p40 = scmp.eq.s32.totalorder %s39, 0
      %s42 = sadd.s32 %s41, 1
      %s43 = scalar_select %p40, %s41, %s42
      %p46 = pneg %p40
      %p47 = scmp.eq.s32.totalorder %s19, 1
      %p48 = por %p46, %p47
      %p49 = scmp.ne.s32.totalorder %s41, %s44
      %p50 = scmp.eq.s32.totalorder %s19, 0
      %p51 = por %p49, %p50
      %p52 = scmp.ne.s32.totalorder %s41, %s44
      %p53 = scmp.eq.s32.totalorder %s24, 1
      %p54 = por %p52, %p53
      %p55 = scmp.ne.s32.totalorder %s44, %s45
      %p56 = scmp.eq.s32.totalorder %s24, 0
      %p57 = por %p55, %p56
      %p58 = scmp.ne.s32.totalorder %s44, %s45
      %p59 = scmp.eq.s32.totalorder %s25, 1
      %p60 = por %p58, %p59
      %p62 = scmp.ne.s32.totalorder %s45, %s61
      %p63 = scmp.eq.s32.totalorder %s25, 0
      %p64 = por %p62, %p63
      %s66 = sadd.s32 %s65, 1
      %p69 = scmp.eq.s32.totalorder %s19, 1
      %p70 = scmp.ne.s32.totalorder %s65, %s67
      %p71 = scmp.eq.s32.totalorder %s19, 0
      %p72 = por %p70, %p71
      %p73 = scmp.ne.s32.totalorder %s65, %s67
      %p74 = scmp.eq.s32.totalorder %s24, 1
      %p75 = por %p73, %p74
      %p76 = scmp.ne.s32.totalorder %s67, %s68
      %p77 = scmp.eq.s32.totalorder %s24, 0
      %p78 = por %p76, %p77
      %p79 = scmp.ne.s32.totalorder %s67, %s68
      %p80 = scmp.eq.s32.totalorder %s25, 1
      %p81 = por %p79, %p80
      %p83 = scmp.ne.s32.totalorder %s68, %s82
      %p84 = scmp.eq.s32.totalorder %s25, 0
      %p85 = por %p83, %p84
      %s87 = sadd.s32 %s86, 1
      %p90 = scmp.eq.s32.totalorder %s19, 1
      %p91 = scmp.ne.s32.totalorder %s86, %s88
      %p92 = scmp.eq.s32.totalorder %s19, 0
      %p93 = por %p91, %p92
      %p94 = scmp.ne.s32.totalorder %s86, %s88
      %p95 = scmp.eq.s32.totalorder %s24, 1
      %p96 = por %p94, %p95
      %p97 = scmp.ne.s32.totalorder %s88, %s89
      %p98 = scmp.eq.s32.totalorder %s24, 0
      %p99 = por %p97, %p98
      %p100 = scmp.ne.s32.totalorder %s88, %s89
      %p101 = scmp.eq.s32.totalorder %s25, 1
      %p102 = por %p100, %p101
      %p104 = scmp.ne.s32.totalorder %s89, %s103
      %p105 = scmp.eq.s32.totalorder %s25, 0
      %p106 = por %p104, %p105
      %s108 = sadd.s32 %s107, 1
      %p111 = scmp.eq.s32.totalorder %s19, 1
      %p112 = scmp.ne.s32.totalorder %s107, %s109
      %p113 = scmp.eq.s32.totalorder %s19, 0
      %p114 = por %p112, %p113
      %p115 = scmp.ne.s32.totalorder %s107, %s109
      %p116 = scmp.eq.s32.totalorder %s24, 1
      %p117 = por %p115, %p116
      %p118 = scmp.ne.s32.totalorder %s109, %s110
      %p119 = scmp.eq.s32.totalorder %s24, 0
      %p120 = por %p118, %p119
      %p121 = scmp.ne.s32.totalorder %s109, %s110
      %p122 = scmp.eq.s32.totalorder %s25, 1
      %p123 = por %p121, %p122
      %p125 = scmp.ne.s32.totalorder %s110, %s124
      %p126 = scmp.eq.s32.totalorder %s25, 0
      %p127 = por %p125, %p126
      %s129 = sadd.s32 %s128, 1
      %p132 = scmp.eq.s32.totalorder %s19, 1
      %p133 = scmp.ne.s32.totalorder %s128, %s130
      %p134 = scmp.eq.s32.totalorder %s19, 0
      %p135 = por %p133, %p134
      %p136 = scmp.ne.s32.totalorder %s128, %s130
      %p137 = scmp.eq.s32.totalorder %s24, 1
      %p138 = por %p136, %p137
      %p139 = scmp.ne.s32.totalorder %s130, %s131
      %p140 = scmp.eq.s32.totalorder %s24, 0
      %p141 = por %p139, %p140
      %p142 = scmp.ne.s32.totalorder %s130, %s131
      %p143 = scmp.eq.s32.totalorder %s25, 1
      %p144 = por %p142, %p143
      %p146 = scmp.ne.s32.totalorder %s131, %s145
      %p147 = scmp.eq.s32.totalorder %s25, 0
      %p148 = por %p146, %p147
      %s149 = ssub.s32 %s26, %s38
      %s150 = ssub.s32 %s27, %s34
      %s151 = sor.u32 %s149, %s150
      %p152 = scmp.eq.s32.totalorder %s151, 0
      %s154 = sadd.s32 %s153, 1
      %s155 = scalar_select %p152, %s153, %s154
      %p158 = pneg %p152
      %p159 = scmp.eq.s32.totalorder %s19, 1
      %p160 = por %p158, %p159
      %p161 = scmp.ne.s32.totalorder %s153, %s156
      %p162 = scmp.eq.s32.totalorder %s19, 0
      %p163 = por %p161, %p162
      %p164 = scmp.ne.s32.totalorder %s153, %s156
      %p165 = scmp.eq.s32.totalorder %s24, 1
      %p166 = por %p164, %p165
      %p167 = scmp.ne.s32.totalorder %s156, %s157
      %p168 = scmp.eq.s32.totalorder %s24, 0
      %p169 = por %p167, %p168
      %p170 = scmp.ne.s32.totalorder %s156, %s157
      %p171 = scmp.eq.s32.totalorder %s25, 1
      %p172 = por %p170, %p171
      %p174 = scmp.ne.s32.totalorder %s157, %s173
      %p175 = scmp.eq.s32.totalorder %s25, 0
      %p176 = por %p174, %p175
      %p177 = scmp.le.s32.totalorder 1, %s19
      %p178 = scmp.lt.s32.totalorder %s19, 3
      %p179 = pnand %p177, %p178
      %p180 = pneg %p179
      // Predicated region
      $region9: #{tpu_custom_call.1} parent=5 // pred_check
        _
      $region10: #{tpu_custom_call.1} parent=5 // pred_check_branch
        %182 = sbr.rel (%p179) target = $region12
      $region11: #{tpu_custom_call.1} parent=5 // pred_region
        %s183 = ssub.s32 %s19, 1
        // Predicated region
        $region13: #{tpu_custom_call.1} parent=11 // pred_check
          %p184 = pneg %p78
        $region14: #{tpu_custom_call.1} parent=11 // pred_check_branch
          %186 = sbr.rel (%p184) target = $region16
        $region15: #{tpu_custom_call.1} parent=11 // pred_region
          %s188 = ssub.s32 384, 384
          %189 = vsyncadd [#allocation8], %s188
          %s190 = sshll.u32 [#allocation7], 4
          %s191 = int_to_ptr.vmem [resolvable:$true] %s190
          %196 = dma.hbm_to_vmem [thread:$0]  %s1, 384, %s191, [#allocation8], 128, 128, 8
        $region16: #{tpu_custom_call.1} parent=11 // pred_fallthru
          _
        // Predicated region
        $region17: #{tpu_custom_call.1} parent=11 // pred_check
          %p197 = pneg %p99
        $region18: #{tpu_custom_call.1} parent=11 // pred_check_branch
          %199 = sbr.rel (%p197) target = $region20
        $region19: #{tpu_custom_call.1} parent=11 // pred_region
          %s201 = ssub.s32 16, 16
          %202 = vsyncadd [#allocation8], %s201
          %s204 = sshll.u32 [#allocation9], 4
          %s205 = int_to_ptr.vmem [resolvable:$true] %s204
          %207 = dma.hbm_to_vmem [thread:$0]  %s2, 16, %s205, [#allocation8]
        $region20: #{tpu_custom_call.1} parent=11 // pred_fallthru
          _
        // Predicated region
        $region21: #{tpu_custom_call.1} parent=11 // pred_check
          %p208 = pneg %p120
        $region22: #{tpu_custom_call.1} parent=11 // pred_check_branch
          %210 = sbr.rel (%p208) target = $region24
        $region23: #{tpu_custom_call.1} parent=11 // pred_region
          %s212 = ssub.s32 384, 384
          %213 = vsyncadd [#allocation11], %s212
          %s214 = sshll.u32 [#allocation10], 4
          %s215 = int_to_ptr.vmem [resolvable:$true] %s214
          %220 = dma.hbm_to_vmem [thread:$0]  %s3, 384, %s215, [#allocation11], 128, 128, 8
        $region24: #{tpu_custom_call.1} parent=11 // pred_fallthru
          _
        // Predicated region
        $region25: #{tpu_custom_call.1} parent=11 // pred_check
          %p221 = pneg %p141
        $region26: #{tpu_custom_call.1} parent=11 // pred_check_branch
          %223 = sbr.rel (%p221) target = $region28
        $region27: #{tpu_custom_call.1} parent=11 // pred_region
          %s225 = ssub.s32 16, 16
          %226 = vsyncadd [#allocation11], %s225
          %s228 = sshll.u32 [#allocation12], 4
          %s229 = int_to_ptr.vmem [resolvable:$true] %s228
          %231 = dma.hbm_to_vmem [thread:$0]  %s4, 16, %s229, [#allocation11]
        $region28: #{tpu_custom_call.1} parent=11 // pred_fallthru
          _
      $region12: #{tpu_custom_call.1} parent=5 // pred_fallthru
        _
      %p232 = scmp.lt.s32.totalorder %s19, 2
      // Predicated region
      $region29: #{tpu_custom_call.1} parent=5 // pred_check
        %p233 = pneg %p232
      $region30: #{tpu_custom_call.1} parent=5 // pred_check_branch
        %235 = sbr.rel (%p233) target = $region32
      $region31: #{tpu_custom_call.1} parent=5 // pred_region
        // Predicated region
        $region33: #{tpu_custom_call.1} parent=31 // pred_check
          %p236 = pneg %p51
        $region34: #{tpu_custom_call.1} parent=31 // pred_check_branch
          %238 = sbr.rel (%p236) target = $region36
        $region35: #{tpu_custom_call.1} parent=31 // pred_region
          %s239 = sand.u32 %s41, 1
          %s240 = scalar_lea.sflag [#allocation5], %s239
          %s241 = sand.u32 %s41, 1
          %s242 = smul.addr %s241, 24
          %s243 = scalar_lea.vmem [#allocation4], %s242
          %s245 = ssub.s32 384, 384
          %246 = vsyncadd %s240, %s245
          %s247 = smul.addr %s26, 3
          %s248 = smul.addr %s247, 128
          %s249 = scalar_lea.hbm %s0, %s248
          %s250 = sshll.u32 %s243, 4
          %s251 = int_to_ptr.vmem [resolvable:$true] %s250
          %256 = dma.hbm_to_vmem [thread:$0]  %s249, 384, %s251, %s240, 128, 128, 8
        $region36: #{tpu_custom_call.1} parent=31 // pred_fallthru
          _
      $region32: #{tpu_custom_call.1} parent=5 // pred_fallthru
        _
      %p257 = scmp.le.s32.totalorder 1, %s19
      %p258 = scmp.lt.s32.totalorder %s19, 3
      %p259 = pnand %p257, %p258
      %p260 = pneg %p259
      // Predicated region
      $region37: #{tpu_custom_call.1} parent=5 // pred_check
        _
      $region38: #{tpu_custom_call.1} parent=5 // pred_check_branch
        %262 = sbr.rel (%p259) target = $region40
      $region39: #{tpu_custom_call.1} parent=5 // pred_region
        %s263 = ssub.s32 %s19, 1
        %s264 = sand.u32 %s44, 1
        %s265 = scalar_lea.sflag [#allocation5], %s264
        %s266 = sand.u32 %s44, 1
        %s267 = smul.addr %s266, 24
        %s268 = scalar_lea.vmem [#allocation4], %s267
        // Predicated region
        $region41: #{tpu_custom_call.1} parent=39 // pred_check
          %p269 = pneg %p57
        $region42: #{tpu_custom_call.1} parent=39 // pred_check_branch
          %271 = sbr.rel (%p269) target = $region44
        $region43: #{tpu_custom_call.1} parent=39 // pred_region
          %272 = dma.done %s265, 384
        $region44: #{tpu_custom_call.1} parent=39 // pred_fallthru
          _
        // Predicated region
        $region45: #{tpu_custom_call.1} parent=39 // pred_check
          %p273 = pneg %p78
        $region46: #{tpu_custom_call.1} parent=39 // pred_check_branch
          %275 = sbr.rel (%p273) target = $region48
        $region47: #{tpu_custom_call.1} parent=39 // pred_region
          %276 = dma.done [#allocation8], 384
        $region48: #{tpu_custom_call.1} parent=39 // pred_fallthru
          _
        // Predicated region
        $region49: #{tpu_custom_call.1} parent=39 // pred_check
          %p277 = pneg %p99
        $region50: #{tpu_custom_call.1} parent=39 // pred_check_branch
          %279 = sbr.rel (%p277) target = $region52
        $region51: #{tpu_custom_call.1} parent=39 // pred_region
          %280 = dma.done [#allocation8], 16
        $region52: #{tpu_custom_call.1} parent=39 // pred_fallthru
          _
        // Predicated region
        $region53: #{tpu_custom_call.1} parent=39 // pred_check
          %p281 = pneg %p120
        $region54: #{tpu_custom_call.1} parent=39 // pred_check_branch
          %283 = sbr.rel (%p281) target = $region56
        $region55: #{tpu_custom_call.1} parent=39 // pred_region
          %284 = dma.done [#allocation11], 384
        $region56: #{tpu_custom_call.1} parent=39 // pred_fallthru
          _
        // Predicated region
        $region57: #{tpu_custom_call.1} parent=39 // pred_check
          %p285 = pneg %p141
        $region58: #{tpu_custom_call.1} parent=39 // pred_check_branch
          %287 = sbr.rel (%p285) target = $region60
        $region59: #{tpu_custom_call.1} parent=39 // pred_region
          %288 = dma.done [#allocation11], 16
        $region60: #{tpu_custom_call.1} parent=39 // pred_fallthru
          _
        %s289 = sand.u32 %s44, 1
        %s290 = scalar_lea.sflag [#allocation5], %s289
        %s291 = sand.u32 %s44, 1
        %s292 = smul.addr %s291, 24
        %s293 = scalar_lea.vmem [#allocation4], %s292
        %p294 = pneg %p57
        %p295 = pneg %p54
        %p296 = pneg %p78
        %p297 = pneg %p75
        %p298 = pneg %p99
        %p299 = pneg %p96
        %p300 = pneg %p120
        %p301 = pneg %p117
        %p302 = pneg %p141
        %p303 = pneg %p138
        %p304 = pneg %p169
        %p305 = pneg %p166
        %s306 = sand.u32 %s156, 1
        %s307 = scalar_lea.sflag [#allocation6], %s306
        %s308 = sand.u32 %s156, 1
        %s309 = smul.addr %s308, 16
        %s310 = scalar_lea.vmem [#allocation13], %s309
        %s311 = smul.u32 2, %s29
        %s312 = smul.u32 %s29, 16
        %s313 = scalar_lea.vmem %s268, %s312 [#allocation4]
        %v314 = vld [vmem:[%s313] sm:$0xff]
        %v315 = vld [vmem:[%s313 + $0x8] sm:$0xff]
        %v316 = vld [vmem:[%s313 + $0x10] sm:$0xf]
        %v317 = vmul.f32 %v314, 0.5
        %v318 = vmul.f32 %v315, 0.5
        %v319 = vmul.f32 %v316, 0.5
        %v320 = vmul.f32 %v314, 0.70710677
        %v321 = vmul.f32 %v315, 0.70710677
        %v322 = vmul.f32 %v316, 0.70710677
        %v323 = verf.f32.pop %v320
        %v324 = verf.f32.pop %v321
        %v325 = verf.f32.pop %v322
        %v326 = vadd.f32 %v323, 1.0
        %v327 = vadd.f32 %v324, 1.0
        %v328 = vadd.f32 %v325, 1.0
        %v329 = vmul.f32 %v317, %v326
        %v330 = vmul.f32 %v318, %v327
        %v331 = vmul.f32 %v319, %v328
        %vm332 = vcmask 64512
        %333 = vst.msk [vmem:[#allocation2] sm:$0xff] %vm332, %v329
        %334 = vst.msk [vmem:[#allocation2 + $0x8] sm:$0xff] %vm332, %v330
        %vm335 = vcmask 60416
        %336 = vst.msk [vmem:[#allocation2 + $0x10] sm:$0xf] %vm335, %v331
        %v337 = vld [vmem:[#allocation2] sm:$0xff]
        %v338 = vld [vmem:[#allocation2 + $0x8] sm:$0xff]
        %v339 = vld [vmem:[#allocation2 + $0x10] sm:$0x3]
        %v340 = vld [vmem:[#allocation7] sm:$0xff]
        %v341 = vld [vmem:[#allocation2 + $0x1] sm:$0xff]
        %v342 = vld [vmem:[#allocation2 + $0x9] sm:$0xff]
        %v343 = vld [vmem:[#allocation2 + $0x11] sm:$0x3]
        %s344 = scalar_lea.vmem [#allocation7], 8
        %v345 = vld [vmem:[%s344] sm:$0xff]
        %v347 = vsel %vm332, %v341, 0
        %v350 = vsel %vm332, %v342, 0
        %v353 = vsel %vm332, %v343, 0
        %355 = vmatprep.subr.mxu0 0.0
        %356 = vmatpush1.msra.mxu0 %v345
        %357 = vmatprep.subr.mxu0 0.0
        %358 = vmatpush1.msra.mxu0 0.0
        %359 = vmatprep.subr.mxu0 0.0
        %360 = vmatpush1.msra.mxu0 0.0
        %361 = vmatprep.subr.mxu0 0.0
        %362 = vmatpush1.msra.mxu0 0.0
        %363 = vmatprep.subr.mxu0 0.0
        %364 = vmatpush1.msra.mxu0 0.0
        %365 = vmatprep.subr.mxu0 0.0
        %366 = vmatpush1.msra.mxu0 0.0
        %367 = vmatprep.subr.mxu0 0.0
        %368 = vmatpush1.msra.mxu0 0.0
        %369 = vmatprep.subr.mxu0 0.0
        %370 = vmatpush1.msra.mxu0 0.0
        %371 = vmatprep.subr.mxu0 0.0
        %372 = vmatpush1.msra.mxu0 0.0
        %373 = vmatprep.subr.mxu0 0.0
        %374 = vmatpush1.msra.mxu0 0.0
        %375 = vmatprep.subr.mxu0 0.0
        %376 = vmatpush1.msra.mxu0 0.0
        %377 = vmatprep.subr.mxu0 0.0
        %378 = vmatpush1.msra.mxu0 0.0
        %379 = vmatprep.subr.mxu0 0.0
        %380 = vmatpush1.msra.mxu0 0.0
        %381 = vmatprep.subr.mxu0 0.0
        %382 = vmatpush1.msra.mxu0 0.0
        %383 = vmatprep.subr.mxu0 0.0
        %384 = vmatpush1.msra.mxu0 0.0
        %385 = vmatprep.subr.mxu0 0.0
        %386 = vmatpush1.msra.mxu0 0.0
        %387 = vmatprep.subr.mxu0 0.0
        %388 = vmatpush1.msra.mxu0 0.0
        %389 = vmatprep.subr.mxu0 0.0
        %390 = vmatpush1.msra.mxu0 0.0
        %391 = vmatprep.subr.mxu0 0.0
        %392 = vmatpush1.msra.mxu0 0.0
        %393 = vmatprep.subr.mxu0 0.0
        %394 = vmatpush1.msra.mxu0 0.0
        %395 = vmatprep.subr.mxu0 0.0
        %396 = vmatpush1.msra.mxu0 0.0
        %397 = vmatprep.subr.mxu0 0.0
        %398 = vmatpush1.msra.mxu0 0.0
        %399 = vmatprep.subr.mxu0 0.0
        %400 = vmatpush1.msra.mxu0 0.0
        %401 = vmatprep.subr.mxu0 0.0
        %402 = vmatpush1.msra.mxu0 0.0
        %403 = vmatprep.subr.mxu0 0.0
        %404 = vmatpush1.msra.mxu0 0.0
        %405 = vmatprep.subr.mxu0 0.0
        %406 = vmatpush1.msra.mxu0 0.0
        %407 = vmatprep.subr.mxu0 0.0
        %408 = vmatpush1.msra.mxu0 0.0
        %409 = vmatprep.subr.mxu0 0.0
        %410 = vmatpush1.msra.mxu0 0.0
        %411 = vmatprep.subr.mxu0 0.0
        %412 = vmatpush1.msra.mxu0 0.0
        %413 = vmatprep.subr.mxu0 0.0
        %414 = vmatpush1.msra.mxu0 0.0
        %415 = vmatprep.subr.mxu0 0.0
        %416 = vmatpush1.msra.mxu0 0.0
        %417 = vmatprep.subr.mxu0 0.0
        %418 = vmatpush1.msra.mxu0 0.0
        %419 = vmatprep.mubr.f32.mxu0 0.0
        %420 = vmatmul.mubr.f32.gmra.mrb[0].mxu0 %v347
        %v421 = vpop.f32.mrb[0].mxu0
        %v422 = vadd.f32 0.0, %v421
        %v423 = vpop.f32.mrb[0].mxu0
        %424 = vmatprep.mubr.f32.mxu0 0.0
        %425 = vmatmul.mubr.f32.gmra.mrb[0].mxu0 %v350
        %v426 = vpop.f32.mrb[0].mxu0
        %v427 = vadd.f32 0.0, %v426
        %v428 = vpop.f32.mrb[0].mxu0
        %429 = vmatprep.mubr.f32.mxu0 0.0
        %430 = vmatmul.mubr.f32.gmra.mrb[0].mxu0 %v353
        %v431 = vpop.f32.mrb[0].mxu0
        %v432 = vadd.f32 0.0, %v431
        %v433 = vpop.f32.mrb[0].mxu0
        %434 = vdwg.mxu0
        %v436 = vsel %vm332, %v337, 0
        %v439 = vsel %vm332, %v338, 0
        %v442 = vsel %vm332, %v339, 0
        %444 = vmatprep.subr.mxu0 0.0
        %445 = vmatpush1.msra.mxu0 %v340
        %446 = vmatprep.subr.mxu0 0.0
        %447 = vmatpush1.msra.mxu0 0.0
        %448 = vmatprep.subr.mxu0 0.0
        %449 = vmatpush1.msra.mxu0 0.0
        %450 = vmatprep.subr.mxu0 0.0
        %451 = vmatpush1.msra.mxu0 0.0
        %452 = vmatprep.subr.mxu0 0.0
        %453 = vmatpush1.msra.mxu0 0.0
        %454 = vmatprep.subr.mxu0 0.0
        %455 = vmatpush1.msra.mxu0 0.0
        %456 = vmatprep.subr.mxu0 0.0
        %457 = vmatpush1.msra.mxu0 0.0
        %458 = vmatprep.subr.mxu0 0.0
        %459 = vmatpush1.msra.mxu0 0.0
        %460 = vmatprep.subr.mxu0 0.0
        %461 = vmatpush1.msra.mxu0 0.0
        %462 = vmatprep.subr.mxu0 0.0
        %463 = vmatpush1.msra.mxu0 0.0
        %464 = vmatprep.subr.mxu0 0.0
        %465 = vmatpush1.msra.mxu0 0.0
        %466 = vmatprep.subr.mxu0 0.0
        %467 = vmatpush1.msra.mxu0 0.0
        %468 = vmatprep.subr.mxu0 0.0
        %469 = vmatpush1.msra.mxu0 0.0
        %470 = vmatprep.subr.mxu0 0.0
        %471 = vmatpush1.msra.mxu0 0.0
        %472 = vmatprep.subr.mxu0 0.0
        %473 = vmatpush1.msra.mxu0 0.0
        %474 = vmatprep.subr.mxu0 0.0
        %475 = vmatpush1.msra.mxu0 0.0
        %476 = vmatprep.subr.mxu0 0.0
        %477 = vmatpush1.msra.mxu0 0.0
        %478 = vmatprep.subr.mxu0 0.0
        %479 = vmatpush1.msra.mxu0 0.0
        %480 = vmatprep.subr.mxu0 0.0
        %481 = vmatpush1.msra.mxu0 0.0
        %482 = vmatprep.subr.mxu0 0.0
        %483 = vmatpush1.msra.mxu0 0.0
        %484 = vmatprep.subr.mxu0 0.0
        %485 = vmatpush1.msra.mxu0 0.0
        %486 = vmatprep.subr.mxu0 0.0
        %487 = vmatpush1.msra.mxu0 0.0
        %488 = vmatprep.subr.mxu0 0.0
        %489 = vmatpush1.msra.mxu0 0.0
        %490 = vmatprep.subr.mxu0 0.0
        %491 = vmatpush1.msra.mxu0 0.0
        %492 = vmatprep.subr.mxu0 0.0
        %493 = vmatpush1.msra.mxu0 0.0
        %494 = vmatprep.subr.mxu0 0.0
        %495 = vmatpush1.msra.mxu0 0.0
        %496 = vmatprep.subr.mxu0 0.0
        %497 = vmatpush1.msra.mxu0 0.0
        %498 = vmatprep.subr.mxu0 0.0
        %499 = vmatpush1.msra.mxu0 0.0
        %500 = vmatprep.subr.mxu0 0.0
        %501 = vmatpush1.msra.mxu0 0.0
        %502 = vmatprep.subr.mxu0 0.0
        %503 = vmatpush1.msra.mxu0 0.0
        %504 = vmatprep.subr.mxu0 0.0
        %505 = vmatpush1.msra.mxu0 0.0
        %506 = vmatprep.subr.mxu0 0.0
        %507 = vmatpush1.msra.mxu0 0.0
        %508 = vmatprep.mubr.f32.mxu0 0.0
        %509 = vmatmul.mubr.f32.gmra.mrb[0].mxu0 %v436
        %v510 = vpop.f32.mrb[0].mxu0
        %v511 = vadd.f32 %v422, %v510
        %v512 = vpop.f32.mrb[0].mxu0
        %513 = vmatprep.mubr.f32.mxu0 0.0
        %514 = vmatmul.mubr.f32.gmra.mrb[0].mxu0 %v439
        %v515 = vpop.f32.mrb[0].mxu0
        %v516 = vadd.f32 %v427, %v515
        %v517 = vpop.f32.mrb[0].mxu0
        %518 = vmatprep.mubr.f32.mxu0 0.0
        %519 = vmatmul.mubr.f32.gmra.mrb[0].mxu0 %v442
        %v520 = vpop.f32.mrb[0].mxu0
        %v521 = vadd.f32 %v432, %v520
        %v522 = vpop.f32.mrb[0].mxu0
        %523 = vdwg.mxu0
        %v524 = vld [vmem:[#allocation2 + $0x2] sm:$0xff]
        %v525 = vld [vmem:[#allocation2 + $0xa] sm:$0xff]
        %v526 = vld [vmem:[#allocation2 + $0x12] sm:$0x3]
        %s527 = scalar_lea.vmem [#allocation7], 16
        %v528 = vld [vmem:[%s527] sm:$0xff]
        %v530 = vsel %vm332, %v524, 0
        %v533 = vsel %vm332, %v525, 0
        %v536 = vsel %vm332, %v526, 0
        %538 = vmatprep.subr.mxu0 0.0
        %539 = vmatpush1.msra.mxu0 %v528
        %540 = vmatprep.subr.mxu0 0.0
        %541 = vmatpush1.msra.mxu0 0.0
        %542 = vmatprep.subr.mxu0 0.0
        %543 = vmatpush1.msra.mxu0 0.0
        %544 = vmatprep.subr.mxu0 0.0
        %545 = vmatpush1.msra.mxu0 0.0
        %546 = vmatprep.subr.mxu0 0.0
        %547 = vmatpush1.msra.mxu0 0.0
        %548 = vmatprep.subr.mxu0 0.0
        %549 = vmatpush1.msra.mxu0 0.0
        %550 = vmatprep.subr.mxu0 0.0
        %551 = vmatpush1.msra.mxu0 0.0
        %552 = vmatprep.subr.mxu0 0.0
        %553 = vmatpush1.msra.mxu0 0.0
        %554 = vmatprep.subr.mxu0 0.0
        %555 = vmatpush1.msra.mxu0 0.0
        %556 = vmatprep.subr.mxu0 0.0
        %557 = vmatpush1.msra.mxu0 0.0
        %558 = vmatprep.subr.mxu0 0.0
        %559 = vmatpush1.msra.mxu0 0.0
        %560 = vmatprep.subr.mxu0 0.0
        %561 = vmatpush1.msra.mxu0 0.0
        %562 = vmatprep.subr.mxu0 0.0
        %563 = vmatpush1.msra.mxu0 0.0
        %564 = vmatprep.subr.mxu0 0.0
        %565 = vmatpush1.msra.mxu0 0.0
        %566 = vmatprep.subr.mxu0 0.0
        %567 = vmatpush1.msra.mxu0 0.0
        %568 = vmatprep.subr.mxu0 0.0
        %569 = vmatpush1.msra.mxu0 0.0
        %570 = vmatprep.subr.mxu0 0.0
        %571 = vmatpush1.msra.mxu0 0.0
        %572 = vmatprep.subr.mxu0 0.0
        %573 = vmatpush1.msra.mxu0 0.0
        %574 = vmatprep.subr.mxu0 0.0
        %575 = vmatpush1.msra.mxu0 0.0
        %576 = vmatprep.subr.mxu0 0.0
        %577 = vmatpush1.msra.mxu0 0.0
        %578 = vmatprep.subr.mxu0 0.0
        %579 = vmatpush1.msra.mxu0 0.0
        %580 = vmatprep.subr.mxu0 0.0
        %581 = vmatpush1.msra.mxu0 0.0
        %582 = vmatprep.subr.mxu0 0.0
        %583 = vmatpush1.msra.mxu0 0.0
        %584 = vmatprep.subr.mxu0 0.0
        %585 = vmatpush1.msra.mxu0 0.0
        %586 = vmatprep.subr.mxu0 0.0
        %587 = vmatpush1.msra.mxu0 0.0
        %588 = vmatprep.subr.mxu0 0.0
        %589 = vmatpush1.msra.mxu0 0.0
        %590 = vmatprep.subr.mxu0 0.0
        %591 = vmatpush1.msra.mxu0 0.0
        %592 = vmatprep.subr.mxu0 0.0
        %593 = vmatpush1.msra.mxu0 0.0
        %594 = vmatprep.subr.mxu0 0.0
        %595 = vmatpush1.msra.mxu0 0.0
        %596 = vmatprep.subr.mxu0 0.0
        %597 = vmatpush1.msra.mxu0 0.0
        %598 = vmatprep.subr.mxu0 0.0
        %599 = vmatpush1.msra.mxu0 0.0
        %600 = vmatprep.subr.mxu0 0.0
        %601 = vmatpush1.msra.mxu0 0.0
        %602 = vmatprep.mubr.f32.mxu0 0.0
        %603 = vmatmul.mubr.f32.gmra.mrb[0].mxu0 %v530
        %v604 = vpop.f32.mrb[0].mxu0
        %v605 = vadd.f32 0.0, %v604
        %v606 = vpop.f32.mrb[0].mxu0
        %607 = vmatprep.mubr.f32.mxu0 0.0
        %608 = vmatmul.mubr.f32.gmra.mrb[0].mxu0 %v533
        %v609 = vpop.f32.mrb[0].mxu0
        %v610 = vadd.f32 0.0, %v609
        %v611 = vpop.f32.mrb[0].mxu0
        %612 = vmatprep.mubr.f32.mxu0 0.0
        %613 = vmatmul.mubr.f32.gmra.mrb[0].mxu0 %v536
        %v614 = vpop.f32.mrb[0].mxu0
        %v615 = vadd.f32 0.0, %v614
        %v616 = vpop.f32.mrb[0].mxu0
        %617 = vdwg.mxu0
        %v618 = vadd.f32 %v511, %v605
        %v619 = vadd.f32 %v516, %v610
        %v620 = vadd.f32 %v521, %v615
        %v621 = vld [vmem:[#allocation9] sm:$0x1]
        %v623 = vlaneseq
        %v624 = vshrl.u32 %v623, 7
        %v625 = vsub.s32 0, %v624
        %v626 = vrot.slane %v621, %v625
        %v628 = vadd.f32 %v618, %v626
        %v629 = vadd.f32 %v619, %v626
        %v630 = vadd.f32 %v620, %v626
        %v631 = vlaneseq
        %v632 = vshrl.u32 %v631, 7
        %v633 = vadd.s32 %v632, 8
        %v634 = vadd.s32 %v632, 16
        %s635 = ssub.s32 %s312, 1
        %v636 = vstv %s635
        %v637 = vadd.s32 %v636, %v632
        %v638 = vadd.s32 %v636, %v633
        %v639 = vadd.s32 %v636, %v634
        %vm640 = vcmp.ge.s32.totalorder %v637, 0
        %vm641 = vcmp.ge.s32.totalorder %v638, 0
        %vm642 = vcmp.ge.s32.totalorder %v639, 0
        %vm643 = vcmp.lt.s32.totalorder %v637, 16
        %vm644 = vcmp.lt.s32.totalorder %v638, 16
        %vm645 = vcmp.lt.s32.totalorder %v639, 16
        %vm646 = vmand %vm640, %vm643
        %vm647 = vmand %vm641, %vm644
        %vm648 = vmand %vm642, %vm645
        %v649 = vmul.f32 %v628, 0.5
        %v650 = vmul.f32 %v629, 0.5
        %v651 = vmul.f32 %v630, 0.5
        %v652 = vmul.f32 %v628, 0.70710677
        %v653 = vmul.f32 %v629, 0.70710677
        %v654 = vmul.f32 %v630, 0.70710677
        %v655 = verf.f32.pop %v652
        %v656 = verf.f32.pop %v653
        %v657 = verf.f32.pop %v654
        %v658 = vadd.f32 %v655, 1.0
        %v659 = vadd.f32 %v656, 1.0
        %v660 = vadd.f32 %v657, 1.0
        %v661 = vmul.f32 %v649, %v658
        %v662 = vmul.f32 %v650, %v659
        %v663 = vmul.f32 %v651, %v660
        %v664 = vsel %vm646, 1, 0
        %v665 = vsel %vm647, 1, 0
        %v666 = vsel %vm648, 1, 0
        %vm667 = vcmp.eq.s32.totalorder %v664, 1
        %vm668 = vcmp.eq.s32.totalorder %v665, 1
        %vm669 = vcmp.eq.s32.totalorder %v666, 1
        %v670 = vsel %vm667, %v661, 0.0
        %v671 = vsel %vm668, %v662, 0.0
        %v672 = vsel %vm669, %v663, 0.0
        %673 = vst.msk [vmem:[#allocation3] sm:$0xff] %vm332, %v670
        %674 = vst.msk [vmem:[#allocation3 + $0x8] sm:$0xff] %vm332, %v671
        %vm675 = vcmask 58368
        %676 = vst.msk [vmem:[#allocation3 + $0x10] sm:$0x3] %vm675, %v672
        %v677 = vld [vmem:[#allocation3] sm:$0xff]
        %v678 = vld [vmem:[#allocation3 + $0x8] sm:$0xff]
        %v679 = vld [vmem:[#allocation10] sm:$0xff]
        %v680 = vld [vmem:[#allocation3 + $0x1] sm:$0xff]
        %v681 = vld [vmem:[#allocation3 + $0x9] sm:$0xff]
        %s682 = scalar_lea.vmem [#allocation10], 8
        %v683 = vld [vmem:[%s682] sm:$0xff]
        %v685 = vsel %vm332, %v680, 0
        %v688 = vsel %vm332, %v681, 0
        %690 = vmatprep.subr.mxu0 0.0
        %691 = vmatpush1.msra.mxu0 %v683
        %692 = vmatprep.subr.mxu0 0.0
        %693 = vmatpush1.msra.mxu0 0.0
        %694 = vmatprep.subr.mxu0 0.0
        %695 = vmatpush1.msra.mxu0 0.0
        %696 = vmatprep.subr.mxu0 0.0
        %697 = vmatpush1.msra.mxu0 0.0
        %698 = vmatprep.subr.mxu0 0.0
        %699 = vmatpush1.msra.mxu0 0.0
        %700 = vmatprep.subr.mxu0 0.0
        %701 = vmatpush1.msra.mxu0 0.0
        %702 = vmatprep.subr.mxu0 0.0
        %703 = vmatpush1.msra.mxu0 0.0
        %704 = vmatprep.subr.mxu0 0.0
        %705 = vmatpush1.msra.mxu0 0.0
        %706 = vmatprep.subr.mxu0 0.0
        %707 = vmatpush1.msra.mxu0 0.0
        %708 = vmatprep.subr.mxu0 0.0
        %709 = vmatpush1.msra.mxu0 0.0
        %710 = vmatprep.subr.mxu0 0.0
        %711 = vmatpush1.msra.mxu0 0.0
        %712 = vmatprep.subr.mxu0 0.0
        %713 = vmatpush1.msra.mxu0 0.0
        %714 = vmatprep.subr.mxu0 0.0
        %715 = vmatpush1.msra.mxu0 0.0
        %716 = vmatprep.subr.mxu0 0.0
        %717 = vmatpush1.msra.mxu0 0.0
        %718 = vmatprep.subr.mxu0 0.0
        %719 = vmatpush1.msra.mxu0 0.0
        %720 = vmatprep.subr.mxu0 0.0
        %721 = vmatpush1.msra.mxu0 0.0
        %722 = vmatprep.subr.mxu0 0.0
        %723 = vmatpush1.msra.mxu0 0.0
        %724 = vmatprep.subr.mxu0 0.0
        %725 = vmatpush1.msra.mxu0 0.0
        %726 = vmatprep.subr.mxu0 0.0
        %727 = vmatpush1.msra.mxu0 0.0
        %728 = vmatprep.subr.mxu0 0.0
        %729 = vmatpush1.msra.mxu0 0.0
        %730 = vmatprep.subr.mxu0 0.0
        %731 = vmatpush1.msra.mxu0 0.0
        %732 = vmatprep.subr.mxu0 0.0
        %733 = vmatpush1.msra.mxu0 0.0
        %734 = vmatprep.subr.mxu0 0.0
        %735 = vmatpush1.msra.mxu0 0.0
        %736 = vmatprep.subr.mxu0 0.0
        %737 = vmatpush1.msra.mxu0 0.0
        %738 = vmatprep.subr.mxu0 0.0
        %739 = vmatpush1.msra.mxu0 0.0
        %740 = vmatprep.subr.mxu0 0.0
        %741 = vmatpush1.msra.mxu0 0.0
        %742 = vmatprep.subr.mxu0 0.0
        %743 = vmatpush1.msra.mxu0 0.0
        %744 = vmatprep.subr.mxu0 0.0
        %745 = vmatpush1.msra.mxu0 0.0
        %746 = vmatprep.subr.mxu0 0.0
        %747 = vmatpush1.msra.mxu0 0.0
        %748 = vmatprep.subr.mxu0 0.0
        %749 = vmatpush1.msra.mxu0 0.0
        %750 = vmatprep.subr.mxu0 0.0
        %751 = vmatpush1.msra.mxu0 0.0
        %752 = vmatprep.subr.mxu0 0.0
        %753 = vmatpush1.msra.mxu0 0.0
        %754 = vmatprep.mubr.f32.mxu0 0.0
        %755 = vmatmul.mubr.f32.gmra.mrb[0].mxu0 %v685
        %v756 = vpop.f32.mrb[0].mxu0
        %v757 = vadd.f32 0.0, %v756
        %v758 = vpop.f32.mrb[0].mxu0
        %759 = vmatprep.mubr.f32.mxu0 0.0
        %760 = vmatmul.mubr.f32.gmra.mrb[0].mxu0 %v688
        %v761 = vpop.f32.mrb[0].mxu0
        %v762 = vadd.f32 0.0, %v761
        %v763 = vpop.f32.mrb[0].mxu0
        %764 = vdwg.mxu0
        %v766 = vsel %vm332, %v677, 0
        %v769 = vsel %vm332, %v678, 0
        %771 = vmatprep.subr.mxu0 0.0
        %772 = vmatpush1.msra.mxu0 %v679
        %773 = vmatprep.subr.mxu0 0.0
        %774 = vmatpush1.msra.mxu0 0.0
        %775 = vmatprep.subr.mxu0 0.0
        %776 = vmatpush1.msra.mxu0 0.0
        %777 = vmatprep.subr.mxu0 0.0
        %778 = vmatpush1.msra.mxu0 0.0
        %779 = vmatprep.subr.mxu0 0.0
        %780 = vmatpush1.msra.mxu0 0.0
        %781 = vmatprep.subr.mxu0 0.0
        %782 = vmatpush1.msra.mxu0 0.0
        %783 = vmatprep.subr.mxu0 0.0
        %784 = vmatpush1.msra.mxu0 0.0
        %785 = vmatprep.subr.mxu0 0.0
        %786 = vmatpush1.msra.mxu0 0.0
        %787 = vmatprep.subr.mxu0 0.0
        %788 = vmatpush1.msra.mxu0 0.0
        %789 = vmatprep.subr.mxu0 0.0
        %790 = vmatpush1.msra.mxu0 0.0
        %791 = vmatprep.subr.mxu0 0.0
        %792 = vmatpush1.msra.mxu0 0.0
        %793 = vmatprep.subr.mxu0 0.0
        %794 = vmatpush1.msra.mxu0 0.0
        %795 = vmatprep.subr.mxu0 0.0
        %796 = vmatpush1.msra.mxu0 0.0
        %797 = vmatprep.subr.mxu0 0.0
        %798 = vmatpush1.msra.mxu0 0.0
        %799 = vmatprep.subr.mxu0 0.0
        %800 = vmatpush1.msra.mxu0 0.0
        %801 = vmatprep.subr.mxu0 0.0
        %802 = vmatpush1.msra.mxu0 0.0
        %803 = vmatprep.subr.mxu0 0.0
        %804 = vmatpush1.msra.mxu0 0.0
        %805 = vmatprep.subr.mxu0 0.0
        %806 = vmatpush1.msra.mxu0 0.0
        %807 = vmatprep.subr.mxu0 0.0
        %808 = vmatpush1.msra.mxu0 0.0
        %809 = vmatprep.subr.mxu0 0.0
        %810 = vmatpush1.msra.mxu0 0.0
        %811 = vmatprep.subr.mxu0 0.0
        %812 = vmatpush1.msra.mxu0 0.0
        %813 = vmatprep.subr.mxu0 0.0
        %814 = vmatpush1.msra.mxu0 0.0
        %815 = vmatprep.subr.mxu0 0.0
        %816 = vmatpush1.msra.mxu0 0.0
        %817 = vmatprep.subr.mxu0 0.0
        %818 = vmatpush1.msra.mxu0 0.0
        %819 = vmatprep.subr.mxu0 0.0
        %820 = vmatpush1.msra.mxu0 0.0
        %821 = vmatprep.subr.mxu0 0.0
        %822 = vmatpush1.msra.mxu0 0.0
        %823 = vmatprep.subr.mxu0 0.0
        %824 = vmatpush1.msra.mxu0 0.0
        %825 = vmatprep.subr.mxu0 0.0
        %826 = vmatpush1.msra.mxu0 0.0
        %827 = vmatprep.subr.mxu0 0.0
        %828 = vmatpush1.msra.mxu0 0.0
        %829 = vmatprep.subr.mxu0 0.0
        %830 = vmatpush1.msra.mxu0 0.0
        %831 = vmatprep.subr.mxu0 0.0
        %832 = vmatpush1.msra.mxu0 0.0
        %833 = vmatprep.subr.mxu0 0.0
        %834 = vmatpush1.msra.mxu0 0.0
        %835 = vmatprep.mubr.f32.mxu0 0.0
        %836 = vmatmul.mubr.f32.gmra.mrb[0].mxu0 %v766
        %v837 = vpop.f32.mrb[0].mxu0
        %v838 = vadd.f32 %v757, %v837
        %v839 = vpop.f32.mrb[0].mxu0
        %840 = vmatprep.mubr.f32.mxu0 0.0
        %841 = vmatmul.mubr.f32.gmra.mrb[0].mxu0 %v769
        %v842 = vpop.f32.mrb[0].mxu0
        %v843 = vadd.f32 %v762, %v842
        %v844 = vpop.f32.mrb[0].mxu0
        %845 = vdwg.mxu0
        %v846 = vld [vmem:[#allocation3 + $0x2] sm:$0xff]
        %v847 = vld [vmem:[#allocation3 + $0xa] sm:$0xff]
        %s848 = scalar_lea.vmem [#allocation10], 16
        %v849 = vld [vmem:[%s848] sm:$0xff]
        %v851 = vsel %vm332, %v846, 0
        %v854 = vsel %vm332, %v847, 0
        %856 = vmatprep.subr.mxu0 0.0
        %857 = vmatpush1.msra.mxu0 %v849
        %858 = vmatprep.subr.mxu0 0.0
        %859 = vmatpush1.msra.mxu0 0.0
        %860 = vmatprep.subr.mxu0 0.0
        %861 = vmatpush1.msra.mxu0 0.0
        %862 = vmatprep.subr.mxu0 0.0
        %863 = vmatpush1.msra.mxu0 0.0
        %864 = vmatprep.subr.mxu0 0.0
        %865 = vmatpush1.msra.mxu0 0.0
        %866 = vmatprep.subr.mxu0 0.0
        %867 = vmatpush1.msra.mxu0 0.0
        %868 = vmatprep.subr.mxu0 0.0
        %869 = vmatpush1.msra.mxu0 0.0
        %870 = vmatprep.subr.mxu0 0.0
        %871 = vmatpush1.msra.mxu0 0.0
        %872 = vmatprep.subr.mxu0 0.0
        %873 = vmatpush1.msra.mxu0 0.0
        %874 = vmatprep.subr.mxu0 0.0
        %875 = vmatpush1.msra.mxu0 0.0
        %876 = vmatprep.subr.mxu0 0.0
        %877 = vmatpush1.msra.mxu0 0.0
        %878 = vmatprep.subr.mxu0 0.0
        %879 = vmatpush1.msra.mxu0 0.0
        %880 = vmatprep.subr.mxu0 0.0
        %881 = vmatpush1.msra.mxu0 0.0
        %882 = vmatprep.subr.mxu0 0.0
        %883 = vmatpush1.msra.mxu0 0.0
        %884 = vmatprep.subr.mxu0 0.0
        %885 = vmatpush1.msra.mxu0 0.0
        %886 = vmatprep.subr.mxu0 0.0
        %887 = vmatpush1.msra.mxu0 0.0
        %888 = vmatprep.subr.mxu0 0.0
        %889 = vmatpush1.msra.mxu0 0.0
        %890 = vmatprep.subr.mxu0 0.0
        %891 = vmatpush1.msra.mxu0 0.0
        %892 = vmatprep.subr.mxu0 0.0
        %893 = vmatpush1.msra.mxu0 0.0
        %894 = vmatprep.subr.mxu0 0.0
        %895 = vmatpush1.msra.mxu0 0.0
        %896 = vmatprep.subr.mxu0 0.0
        %897 = vmatpush1.msra.mxu0 0.0
        %898 = vmatprep.subr.mxu0 0.0
        %899 = vmatpush1.msra.mxu0 0.0
        %900 = vmatprep.subr.mxu0 0.0
        %901 = vmatpush1.msra.mxu0 0.0
        %902 = vmatprep.subr.mxu0 0.0
        %903 = vmatpush1.msra.mxu0 0.0
        %904 = vmatprep.subr.mxu0 0.0
        %905 = vmatpush1.msra.mxu0 0.0
        %906 = vmatprep.subr.mxu0 0.0
        %907 = vmatpush1.msra.mxu0 0.0
        %908 = vmatprep.subr.mxu0 0.0
        %909 = vmatpush1.msra.mxu0 0.0
        %910 = vmatprep.subr.mxu0 0.0
        %911 = vmatpush1.msra.mxu0 0.0
        %912 = vmatprep.subr.mxu0 0.0
        %913 = vmatpush1.msra.mxu0 0.0
        %914 = vmatprep.subr.mxu0 0.0
        %915 = vmatpush1.msra.mxu0 0.0
        %916 = vmatprep.subr.mxu0 0.0
        %917 = vmatpush1.msra.mxu0 0.0
        %918 = vmatprep.subr.mxu0 0.0
        %919 = vmatpush1.msra.mxu0 0.0
        %920 = vmatprep.mubr.f32.mxu0 0.0
        %921 = vmatmul.mubr.f32.gmra.mrb[0].mxu0 %v851
        %v922 = vpop.f32.mrb[0].mxu0
        %v923 = vadd.f32 0.0, %v922
        %v924 = vpop.f32.mrb[0].mxu0
        %925 = vmatprep.mubr.f32.mxu0 0.0
        %926 = vmatmul.mubr.f32.gmra.mrb[0].mxu0 %v854
        %v927 = vpop.f32.mrb[0].mxu0
        %v928 = vadd.f32 0.0, %v927
        %v929 = vpop.f32.mrb[0].mxu0
        %930 = vdwg.mxu0
        %v931 = vadd.f32 %v838, %v923
        %v932 = vadd.f32 %v843, %v928
        %v933 = vld [vmem:[#allocation12] sm:$0x1]
        %v935 = vlaneseq
        %v936 = vshrl.u32 %v935, 7
        %v937 = vsub.s32 0, %v936
        %v938 = vrot.slane %v933, %v937
        %v940 = vadd.f32 %v931, %v938
        %v941 = vadd.f32 %v932, %v938
        %s942 = sadd.s32 %s312, 2
        %s943 = scalar_lea.vmem %s268, %s942 [#allocation4]
        %v944 = vld [vmem:[%s943] sm:$0xff]
        %v945 = vld [vmem:[%s943 + $0x8] sm:$0xff]
        %v946 = vadd.f32 %v940, %v944
        %v947 = vadd.f32 %v941, %v945
        %948 = vst.msk [vmem:[%s310] sm:$0xff] %vm332, %v946
        %949 = vst.msk [vmem:[%s310 + $0x8] sm:$0xff] %vm332, %v947
        %s950 = sand.u32 %s156, 1
        %s951 = scalar_lea.sflag [#allocation6], %s950
        %s952 = sand.u32 %s156, 1
        %s953 = smul.addr %s952, 16
        %s954 = scalar_lea.vmem [#allocation13], %s953
        // Predicated region
        $region61: #{tpu_custom_call.1} parent=39 // pred_check
          %p955 = pneg %p166
        $region62: #{tpu_custom_call.1} parent=39 // pred_check_branch
          %957 = sbr.rel (%p955) target = $region64
        $region63: #{tpu_custom_call.1} parent=39 // pred_region
          %s958 = smul.u32 2, %s29
          %s960 = ssub.s32 256, 256
          %961 = vsyncadd %s951, %s960
          %s962 = smul.addr %s28, 2
          %s963 = sadd.s32 %s958, %s962
          %s964 = smul.addr %s963, 128
          %s965 = scalar_lea.hbm %s5, %s964
          %s966 = sshll.u32 %s954, 4
          %s967 = int_to_ptr.vmem [resolvable:$true] %s966
          %972 = dma.vmem_to_hbm [thread:$0]  %s967, 256, %s965, %s951, 128, 128, 8
        $region64: #{tpu_custom_call.1} parent=39 // pred_fallthru
          _
      $region40: #{tpu_custom_call.1} parent=5 // pred_fallthru
        _
      %p973 = scmp.le.s32.totalorder 2, %s19
      // Predicated region
      $region65: #{tpu_custom_call.1} parent=5 // pred_check
        %p974 = pneg %p973
      $region66: #{tpu_custom_call.1} parent=5 // pred_check_branch
        %976 = sbr.rel (%p974) target = $region68
      $region67: #{tpu_custom_call.1} parent=5 // pred_region
        %s977 = ssub.s32 %s19, 2
        // Predicated region
        $region69: #{tpu_custom_call.1} parent=67 // pred_check
          %p978 = pneg %p172
        $region70: #{tpu_custom_call.1} parent=67 // pred_check_branch
          %980 = sbr.rel (%p978) target = $region72
        $region71: #{tpu_custom_call.1} parent=67 // pred_region
          %s981 = sand.u32 %s157, 1
          %s982 = scalar_lea.sflag [#allocation6], %s981
          %s983 = sand.u32 %s157, 1
          %s984 = smul.addr %s983, 16
          %s985 = scalar_lea.vmem [#allocation13], %s984
          %986 = dma.done %s982, 256
        $region72: #{tpu_custom_call.1} parent=67 // pred_fallthru
          _
      $region68: #{tpu_custom_call.1} parent=5 // pred_fallthru
        _
    $region6: #{tpu_custom_call.1} parent=1 // loop_footer
      %s23 = sadd.s32 1, %s19
    $region7: #{tpu_custom_call.1} parent=1 // loop_footer_branch
      %18 = sbr.rel target = $region3
    $region8: #{tpu_custom_call.1} parent=1 // loop_exit
      _
    %987 = vsyncpa [#allocation5], 1
    %s988 = scalar_lea.sflag [#allocation5], 1
    %989 = vsyncpa %s988, 1
    %990 = vsyncpa [#allocation8], 1
    %991 = vsyncpa [#allocation11], 1
    %992 = vsyncpa [#allocation6], 1
    %s993 = scalar_lea.sflag [#allocation6], 1
    %994 = vsyncpa %s993, 1

</llo_original>
